<compile_context>
chip_gen: v7x
topology: tpu7x:2x2x1
jax: 0.10.0
libtpu: 0.0.40
codegen_flags: <defaults>
</compile_context>

<pallas_src>
import jax
import jax.numpy as jnp
from jax.experimental import pallas as pl
from jax.experimental.pallas import tpu as pltpu


def bilinear_kernel(uid_ref, iid_ref,        # (1, tile) int32 ids, lane-dense
                    u_tab_ref, i_tab_ref,    # (Daug, Nu) / (Daug, Ni) VMEM tables
                    out_ref):                # (1, tile) f32 output block
    uid = uid_ref[...]                       # (1, tile)
    iid = iid_ref[...]
    nu = u_tab_ref.shape[1]
    ni = i_tab_ref.shape[1]
    tile = uid.shape[1]

    # Vectorized gather: one-hot selection matrices fed to the MXU.
    oh_u = (jax.lax.broadcasted_iota(jnp.int32, (nu, tile), 0) == uid
            ).astype(jnp.float32)            # (Nu, tile)
    oh_i = (jax.lax.broadcasted_iota(jnp.int32, (ni, tile), 0) == iid
            ).astype(jnp.float32)            # (Ni, tile)

    gu = jnp.dot(u_tab_ref[...], oh_u,
                 preferred_element_type=jnp.float32)   # (Daug, tile)
    gi = jnp.dot(i_tab_ref[...], oh_i,
                 preferred_element_type=jnp.float32)   # (Daug, tile)

    # score[t] = sum_d U'[uid[t], d] * I'[iid[t], d]  (biases are the extra
    # augmented columns). Sublane reduce -> lane-dense (1, tile) result.
    out_ref[...] = jnp.sum(gu * gi, axis=0, keepdims=True)


def bilinear_net_forward(user_ids, item_ids, user_emb, item_emb,
                         user_bias, item_bias, *, tile=256):
    """Pallas implementation of BilinearNet.forward (default embedding path)."""
    B = user_ids.shape[0]
    Nu, D = user_emb.shape
    Ni = item_emb.shape[0]
    Daug = D + 2

    # Fold biases into augmented embedding columns and pre-transpose so the
    # reduction dim (Daug) is on sublanes and the table row index contracts
    # against the one-hot matrices.
    u_aug = jnp.concatenate(
        [user_emb.astype(jnp.float32),
         user_bias.reshape(Nu, 1).astype(jnp.float32),
         jnp.ones((Nu, 1), jnp.float32)], axis=1)              # (Nu, Daug)
    i_aug = jnp.concatenate(
        [item_emb.astype(jnp.float32),
         jnp.ones((Ni, 1), jnp.float32),
         item_bias.reshape(Ni, 1).astype(jnp.float32)], axis=1)  # (Ni, Daug)
    u_tab_t = u_aug.T   # (Daug, Nu)
    i_tab_t = i_aug.T   # (Daug, Ni)

    # Pad the batch to a multiple of `tile`; padded slots use id 0 (always a
    # valid row) and are sliced off at the end.
    Bp = pl.cdiv(B, tile) * tile
    pad = Bp - B
    uid = jnp.pad(user_ids.astype(jnp.int32), (0, pad)).reshape(1, Bp)
    iid = jnp.pad(item_ids.astype(jnp.int32), (0, pad)).reshape(1, Bp)
    num_tiles = Bp // tile

    # Explicit scoped-VMEM budget (tables are double-buffered by default).
    table_bytes = 4 * (u_tab_t.size + i_tab_t.size)
    vmem_limit = int(min(32 * 1024 * 1024, max(8 * 1024 * 1024,
                                               6 * table_bytes + (4 << 20))))

    out = pl.pallas_call(
        bilinear_kernel,
        out_shape=jax.ShapeDtypeStruct((1, Bp), jnp.float32),
        grid=(num_tiles,),
        in_specs=[
            pl.BlockSpec((1, tile), lambda i: (0, i)),        # user ids
            pl.BlockSpec((1, tile), lambda i: (0, i)),        # item ids
            # Full tables staged in VMEM once (constant block index).
            pl.BlockSpec((Daug, Nu), lambda i: (0, 0)),
            pl.BlockSpec((Daug, Ni), lambda i: (0, 0)),
        ],
        out_specs=pl.BlockSpec((1, tile), lambda i: (0, i)),  # lane-dense output
        compiler_params=pltpu.CompilerParams(
            dimension_semantics=("parallel",),                # tiles independent
            vmem_limit_bytes=vmem_limit),
    )(uid, iid, u_tab_t, i_tab_t)

    # PyTorch: (u*i).sum(1) + user_bias.squeeze() + item_bias.squeeze() -> (B,)
    return out[0, :B]


if __name__ == "__main__":
    # Small deterministic setup consistent with the module's __init__:
    #   ScaledEmbedding(num_users, D): weight ~ Normal(0, 1/D)
    #   ZeroEmbedding(num_rows, 1):    weight initialized to 0 (small non-zero
    #   values used here purely to exercise the bias path of the kernel).
    num_users, num_items, D, B = 64, 96, 32, 500

    key = jax.random.PRNGKey(0)
    k1, k2, k3, k4, k5, k6 = jax.random.split(key, 6)

    user_emb = jax.random.normal(k1, (num_users, D), jnp.float32) * (1.0 / D)
    item_emb = jax.random.normal(k2, (num_items, D), jnp.float32) * (1.0 / D)
    user_bias = jax.random.normal(k5, (num_users, 1), jnp.float32) * 0.01
    item_bias = jax.random.normal(k6, (num_items, 1), jnp.float32) * 0.01

    user_ids = jax.random.randint(k3, (B,), 0, num_users, dtype=jnp.int32)
    item_ids = jax.random.randint(k4, (B,), 0, num_items, dtype=jnp.int32)

    out = bilinear_net_forward(user_ids, item_ids, user_emb, item_emb,
                               user_bias, item_bias)
    out = jax.block_until_ready(out)

    # Pure-JAX reference of the PyTorch forward semantics.
    ref = (jnp.sum(user_emb[user_ids] * item_emb[item_ids], axis=1)
           + user_bias[user_ids, 0] + item_bias[item_ids, 0])

    assert out.shape == (B,), out.shape
    assert jnp.allclose(out, ref, atol=1e-5, rtol=1e-5), (out, ref)
    print("KERNEL_OK")
</pallas_src>

<mosaic_0001>
module attributes {stable_mosaic.version = 11 : i64} {
  func.func @bilinear_kernel(%arg0: i32, %arg1: memref<1x256xi32, #tpu.memory_space<vmem>>, %arg2: memref<1x256xi32, #tpu.memory_space<vmem>>, %arg3: memref<34x64xf32, #tpu.memory_space<vmem>>, %arg4: memref<34x96xf32, #tpu.memory_space<vmem>>, %arg5: memref<1x256xf32, #tpu.memory_space<vmem>>) attributes {dimension_semantics = [#tpu.dimension_semantics<parallel>], iteration_bounds = array<i64: 2>, scalar_prefetch = 0 : i64, scratch_operands = 0 : i64, tpu.core_type = #tpu.core_type<tc>, window_params = [{transform_indices = @transform_0, window_bounds = array<i64: 1, 256>}, {transform_indices = @transform_1, window_bounds = array<i64: 1, 256>}, {pipeline_mode = #tpu.pipeline_mode<synchronous>, transform_indices = @transform_2, window_bounds = array<i64: 34, 64>}, {pipeline_mode = #tpu.pipeline_mode<synchronous>, transform_indices = @transform_3, window_bounds = array<i64: 34, 96>}, {transform_indices = @transform_4, window_bounds = array<i64: 1, 256>}]} {
    %c0 = arith.constant 0 : index
    %c0_0 = arith.constant 0 : index
    %0 = vector.load %arg1[%c0, %c0_0] : memref<1x256xi32, #tpu.memory_space<vmem>>, vector<1x256xi32>
    %c0_1 = arith.constant 0 : index
    %c0_2 = arith.constant 0 : index
    %1 = vector.load %arg2[%c0_1, %c0_2] : memref<1x256xi32, #tpu.memory_space<vmem>>, vector<1x256xi32>
    %2 = tpu.iota {dimensions = array<i32: 0>} : vector<64x256xi32>
    %3 = vector.broadcast %0 : vector<1x256xi32> to vector<64x256xi32>
    %4 = arith.cmpi eq, %2, %3 : vector<64x256xi32>
    %5 = arith.extui %4 : vector<64x256xi1> to vector<64x256xi32>
    %6 = arith.sitofp %5 : vector<64x256xi32> to vector<64x256xf32>
    %7 = tpu.iota {dimensions = array<i32: 0>} : vector<96x256xi32>
    %8 = vector.broadcast %1 : vector<1x256xi32> to vector<96x256xi32>
    %9 = arith.cmpi eq, %7, %8 : vector<96x256xi32>
    %10 = arith.extui %9 : vector<96x256xi1> to vector<96x256xi32>
    %11 = arith.sitofp %10 : vector<96x256xi32> to vector<96x256xf32>
    %c0_3 = arith.constant 0 : index
    %c0_4 = arith.constant 0 : index
    %12 = vector.load %arg3[%c0_3, %c0_4] : memref<34x64xf32, #tpu.memory_space<vmem>>, vector<34x64xf32>
    %cst = arith.constant dense<0.000000e+00> : vector<34x256xf32>
    %13 = tpu.matmul %12, %6, %cst {dimension_numbers = #tpu.dot_dimension_numbers<[1], [0], [0], [1], [0, 0, 1, 1], [], []>} : vector<34x64xf32>, vector<64x256xf32>, vector<34x256xf32> -> vector<34x256xf32>
    %c0_5 = arith.constant 0 : index
    %c0_6 = arith.constant 0 : index
    %14 = vector.load %arg4[%c0_5, %c0_6] : memref<34x96xf32, #tpu.memory_space<vmem>>, vector<34x96xf32>
    %cst_7 = arith.constant dense<0.000000e+00> : vector<34x256xf32>
    %15 = tpu.matmul %14, %11, %cst_7 {dimension_numbers = #tpu.dot_dimension_numbers<[1], [0], [0], [1], [0, 0, 1, 1], [], []>} : vector<34x96xf32>, vector<96x256xf32>, vector<34x256xf32> -> vector<34x256xf32>
    %16 = arith.mulf %13, %15 : vector<34x256xf32>
    %cst_8 = arith.constant dense<0.000000e+00> : vector<256xf32>
    %17 = vector.multi_reduction <add>, %16, %cst_8 [0] : vector<34x256xf32> to vector<256xf32>
    %18 = vector.shape_cast %17 : vector<256xf32> to vector<1x256xf32>
    %c0_9 = arith.constant 0 : index
    %c0_10 = arith.constant 0 : index
    %19 = vector.load %arg5[%c0_9, %c0_10] : memref<1x256xf32, #tpu.memory_space<vmem>>, vector<1x256xf32>
    tpu.vector_store %arg5[%c0_9, %c0_10], %18 {strides = array<i32>} : memref<1x256xf32, #tpu.memory_space<vmem>>, vector<1x256xf32>,
    return
  }
  func.func @transform_0(%arg0: i32) -> (i32, i32) {
    %c0_i32 = arith.constant 0 : i32
    %c0_i32_0 = arith.constant 0 : i32
    return %c0_i32, %arg0 : i32, i32
  }
  func.func @transform_1(%arg0: i32) -> (i32, i32) {
    %c0_i32 = arith.constant 0 : i32
    %c0_i32_0 = arith.constant 0 : i32
    return %c0_i32, %arg0 : i32, i32
  }
  func.func @transform_2(%arg0: i32) -> (i32, i32) {
    %c0_i32 = arith.constant 0 : i32
    %c0_i32_0 = arith.constant 0 : i32
    %c0_i32_1 = arith.constant 0 : i32
    return %c0_i32, %c0_i32_0 : i32, i32
  }
  func.func @transform_3(%arg0: i32) -> (i32, i32) {
    %c0_i32 = arith.constant 0 : i32
    %c0_i32_0 = arith.constant 0 : i32
    %c0_i32_1 = arith.constant 0 : i32
    return %c0_i32, %c0_i32_0 : i32, i32
  }
  func.func @transform_4(%arg0: i32) -> (i32, i32) {
    %c0_i32 = arith.constant 0 : i32
    %c0_i32_0 = arith.constant 0 : i32
    return %c0_i32, %arg0 : i32, i32
  }
}

</mosaic_0001>

<llo_original>
// kernel: tpu_custom_call.1
$region0: #{tpu_custom_call.1}
  #allocation0 [shape = 'u32[]', space=smem, size = 0x4, offset = 0x4, fixed_abs, tag = 'smem constant byte address 0x4 - core index']
  #allocation1 [shape = 'u32[144,128]{1,0:T(1,128)}', space=vmem, size = 0x12000, scoped, tag = 'internal scratch']
  %s0 = inlined_call_operand.hbm [shape: s32[1,512], index: 0, kind: input, shape index: {}]
  %s1 = inlined_call_operand.hbm [shape: s32[1,512], index: 1, kind: input, shape index: {}]
  %s2 = inlined_call_operand.hbm [shape: f32[34,64], index: 2, kind: input, shape index: {}]
  %s3 = inlined_call_operand.hbm [shape: f32[34,96], index: 3, kind: input, shape index: {}]
  %s4 = inlined_call_operand.hbm [shape: f32[1,512], index: 4, kind: output, shape index: {}]
  %s5 = sld [smem:[#allocation0]]
  $region65: #{tpu_custom_call.1} parent=0
    _
  %s7 = ssub.s32 1, %s5
  %s8 = scalar_select 0, %s7, %s5
  $region1: #{tpu_custom_call.1} parent=0
    #allocation2 [shape = 'u8[2048]{0}', space=vmem, size = 0x800, scoped, tag = 'input window, operand 0']
    #allocation3 [shape = 's32[2]{0}', space=sflag, size = 0x8, scoped, tag = 'scoped memory for tpu_custom_call.1']
    #allocation4 [shape = 's32[2]{0}', space=sflag, size = 0x8, scoped, tag = 'scoped memory for tpu_custom_call.1']
    #allocation5 [shape = 'u8[2048]{0}', space=vmem, size = 0x800, scoped, tag = 'input window, operand 1']
    #allocation6 [shape = 's32[2]{0}', space=sflag, size = 0x8, scoped, tag = 'scoped memory for tpu_custom_call.1']
    #allocation7 [shape = 'u8[20480]{0}', space=vmem, size = 0x5000, scoped, tag = 'input window, operand 2, single buffered']
    #allocation8 [shape = 'u8[20480]{0}', space=vmem, size = 0x5000, scoped, tag = 'input window, operand 3, single buffered']
    #allocation9 [shape = 's32[1]{0}', space=sflag, size = 0x4, scoped, tag = 'scoped memory for tpu_custom_call.1']
    #allocation10 [shape = 'u8[2048]{0}', space=vmem, size = 0x800, scoped, tag = 'output window, operand 0']
    %9 = vsyncpa [#allocation3], 0
    %s10 = scalar_lea.sflag [#allocation3], 1
    %11 = vsyncpa %s10, 0
    %12 = vsyncpa [#allocation6], 0
    %s13 = scalar_lea.sflag [#allocation6], 1
    %14 = vsyncpa %s13, 0
    %15 = vsyncpa [#allocation9], 0
    %16 = vsyncpa [#allocation4], 0
    %s17 = scalar_lea.sflag [#allocation4], 1
    %18 = vsyncpa %s17, 0
    loop: start=0, step=1, limit=4
    $region2: #{tpu_custom_call.1} parent=1 // loop_pre_header
      _
    $region3: #{tpu_custom_call.1} parent=1 // loop_header
      %s20 = sphi 0, %s24
      %p21 = scmp.ge.s32.totalorder %s20, 4
      %s30 = sphi 0, %s32
      %s33 = sphi 0, %s30
      %s34 = sphi 0, %s33
      %s50 = sphi 0, %s34
      %s56 = sphi 0, %s58
      %s59 = sphi 0, %s56
      %s60 = sphi 0, %s59
      %s76 = sphi 0, %s60
      %s80 = sphi 0, %s80
      %s82 = sphi 0, %s80
      %s83 = sphi 0, %s82
      %s97 = sphi 0, %s83
      %s101 = sphi 0, %s101
      %s103 = sphi 0, %s101
      %s104 = sphi 0, %s103
      %s118 = sphi 0, %s104
      %s124 = sphi 0, %s126
      %s127 = sphi 0, %s124
      %s128 = sphi 0, %s127
      %s144 = sphi 0, %s128
    $region4: #{tpu_custom_call.1} parent=1 // loop_header_branch
      %23 = sbr.rel (%p21) target = $region8
    $region5: #{tpu_custom_call.1} parent=1 // loop_body
      %s25 = ssub.s32 %s20, 1
      %s26 = ssub.s32 %s20, 2
      %s27 = sadd.s32 %s20, 1
      %s28 = ssub.s32 %s20, %s27
      %p29 = scmp.eq.s32.totalorder %s28, 0
      %s31 = sadd.s32 %s30, 1
      %s32 = scalar_select %p29, %s30, %s31
      %p35 = pneg %p29
      %p36 = scmp.eq.s32.totalorder %s20, 1
      %p37 = por %p35, %p36
      %p38 = scmp.ne.s32.totalorder %s30, %s33
      %p39 = scmp.eq.s32.totalorder %s20, 0
      %p40 = por %p38, %p39
      %p41 = scmp.ne.s32.totalorder %s30, %s33
      %p42 = scmp.eq.s32.totalorder %s25, 1
      %p43 = por %p41, %p42
      %p44 = scmp.ne.s32.totalorder %s33, %s34
      %p45 = scmp.eq.s32.totalorder %s25, 0
      %p46 = por %p44, %p45
      %p47 = scmp.ne.s32.totalorder %s33, %s34
      %p48 = scmp.eq.s32.totalorder %s26, 1
      %p49 = por %p47, %p48
      %p51 = scmp.ne.s32.totalorder %s34, %s50
      %p52 = scmp.eq.s32.totalorder %s26, 0
      %p53 = por %p51, %p52
      %s54 = ssub.s32 %s20, %s27
      %p55 = scmp.eq.s32.totalorder %s54, 0
      %s57 = sadd.s32 %s56, 1
      %s58 = scalar_select %p55, %s56, %s57
      %p61 = pneg %p55
      %p62 = scmp.eq.s32.totalorder %s20, 1
      %p63 = por %p61, %p62
      %p64 = scmp.ne.s32.totalorder %s56, %s59
      %p65 = scmp.eq.s32.totalorder %s20, 0
      %p66 = por %p64, %p65
      %p67 = scmp.ne.s32.totalorder %s56, %s59
      %p68 = scmp.eq.s32.totalorder %s25, 1
      %p69 = por %p67, %p68
      %p70 = scmp.ne.s32.totalorder %s59, %s60
      %p71 = scmp.eq.s32.totalorder %s25, 0
      %p72 = por %p70, %p71
      %p73 = scmp.ne.s32.totalorder %s59, %s60
      %p74 = scmp.eq.s32.totalorder %s26, 1
      %p75 = por %p73, %p74
      %p77 = scmp.ne.s32.totalorder %s60, %s76
      %p78 = scmp.eq.s32.totalorder %s26, 0
      %p79 = por %p77, %p78
      %s81 = sadd.s32 %s80, 1
      %p84 = scmp.eq.s32.totalorder %s20, 1
      %p85 = scmp.ne.s32.totalorder %s80, %s82
      %p86 = scmp.eq.s32.totalorder %s20, 0
      %p87 = por %p85, %p86
      %p88 = scmp.ne.s32.totalorder %s80, %s82
      %p89 = scmp.eq.s32.totalorder %s25, 1
      %p90 = por %p88, %p89
      %p91 = scmp.ne.s32.totalorder %s82, %s83
      %p92 = scmp.eq.s32.totalorder %s25, 0
      %p93 = por %p91, %p92
      %p94 = scmp.ne.s32.totalorder %s82, %s83
      %p95 = scmp.eq.s32.totalorder %s26, 1
      %p96 = por %p94, %p95
      %p98 = scmp.ne.s32.totalorder %s83, %s97
      %p99 = scmp.eq.s32.totalorder %s26, 0
      %p100 = por %p98, %p99
      %s102 = sadd.s32 %s101, 1
      %p105 = scmp.eq.s32.totalorder %s20, 1
      %p106 = scmp.ne.s32.totalorder %s101, %s103
      %p107 = scmp.eq.s32.totalorder %s20, 0
      %p108 = por %p106, %p107
      %p109 = scmp.ne.s32.totalorder %s101, %s103
      %p110 = scmp.eq.s32.totalorder %s25, 1
      %p111 = por %p109, %p110
      %p112 = scmp.ne.s32.totalorder %s103, %s104
      %p113 = scmp.eq.s32.totalorder %s25, 0
      %p114 = por %p112, %p113
      %p115 = scmp.ne.s32.totalorder %s103, %s104
      %p116 = scmp.eq.s32.totalorder %s26, 1
      %p117 = por %p115, %p116
      %p119 = scmp.ne.s32.totalorder %s104, %s118
      %p120 = scmp.eq.s32.totalorder %s26, 0
      %p121 = por %p119, %p120
      %s122 = ssub.s32 %s20, %s27
      %p123 = scmp.eq.s32.totalorder %s122, 0
      %s125 = sadd.s32 %s124, 1
      %s126 = scalar_select %p123, %s124, %s125
      %p129 = pneg %p123
      %p130 = scmp.eq.s32.totalorder %s20, 1
      %p131 = por %p129, %p130
      %p132 = scmp.ne.s32.totalorder %s124, %s127
      %p133 = scmp.eq.s32.totalorder %s20, 0
      %p134 = por %p132, %p133
      %p135 = scmp.ne.s32.totalorder %s124, %s127
      %p136 = scmp.eq.s32.totalorder %s25, 1
      %p137 = por %p135, %p136
      %p138 = scmp.ne.s32.totalorder %s127, %s128
      %p139 = scmp.eq.s32.totalorder %s25, 0
      %p140 = por %p138, %p139
      %p141 = scmp.ne.s32.totalorder %s127, %s128
      %p142 = scmp.eq.s32.totalorder %s26, 1
      %p143 = por %p141, %p142
      %p145 = scmp.ne.s32.totalorder %s128, %s144
      %p146 = scmp.eq.s32.totalorder %s26, 0
      %p147 = por %p145, %p146
      %p148 = scmp.le.s32.totalorder 1, %s20
      %p149 = scmp.lt.s32.totalorder %s20, 3
      %p150 = pnand %p148, %p149
      %p151 = pneg %p150
      // Predicated region
      $region9: #{tpu_custom_call.1} parent=5 // pred_check
        _
      $region10: #{tpu_custom_call.1} parent=5 // pred_check_branch
        %153 = sbr.rel (%p150) target = $region12
      $region11: #{tpu_custom_call.1} parent=5 // pred_region
        %s154 = ssub.s32 %s20, 1
        // Predicated region
        $region13: #{tpu_custom_call.1} parent=11 // pred_check
          %p155 = pneg %p93
        $region14: #{tpu_custom_call.1} parent=11 // pred_check_branch
          %157 = sbr.rel (%p155) target = $region16
        $region15: #{tpu_custom_call.1} parent=11 // pred_region
          %s159 = ssub.s32 640, 640
          %160 = vsyncadd [#allocation6], %s159
          %s161 = sshll.u32 [#allocation7], 4
          %s162 = int_to_ptr.vmem [resolvable:$true] %s161
          %167 = dma.hbm_to_vmem [thread:$0]  %s2, 640, %s162, [#allocation6], 128, 128, 8
        $region16: #{tpu_custom_call.1} parent=11 // pred_fallthru
          _
        // Predicated region
        $region17: #{tpu_custom_call.1} parent=11 // pred_check
          %p168 = pneg %p114
        $region18: #{tpu_custom_call.1} parent=11 // pred_check_branch
          %170 = sbr.rel (%p168) target = $region20
        $region19: #{tpu_custom_call.1} parent=11 // pred_region
          %s172 = ssub.s32 640, 640
          %173 = vsyncadd [#allocation9], %s172
          %s174 = sshll.u32 [#allocation8], 4
          %s175 = int_to_ptr.vmem [resolvable:$true] %s174
          %180 = dma.hbm_to_vmem [thread:$0]  %s3, 640, %s175, [#allocation9], 128, 128, 8
        $region20: #{tpu_custom_call.1} parent=11 // pred_fallthru
          _
      $region12: #{tpu_custom_call.1} parent=5 // pred_fallthru
        _
      %p181 = scmp.lt.s32.totalorder %s20, 2
      // Predicated region
      $region21: #{tpu_custom_call.1} parent=5 // pred_check
        %p182 = pneg %p181
      $region22: #{tpu_custom_call.1} parent=5 // pred_check_branch
        %184 = sbr.rel (%p182) target = $region24
      $region23: #{tpu_custom_call.1} parent=5 // pred_region
        // Predicated region
        $region25: #{tpu_custom_call.1} parent=23 // pred_check
          %p185 = pneg %p40
        $region26: #{tpu_custom_call.1} parent=23 // pred_check_branch
          %187 = sbr.rel (%p185) target = $region28
        $region27: #{tpu_custom_call.1} parent=23 // pred_region
          %s188 = sand.u32 %s30, 1
          %s189 = scalar_lea.sflag [#allocation3], %s188
          %s190 = sand.u32 %s30, 1
          %s191 = smul.addr %s190, 2
          %s192 = scalar_lea.vmem [#allocation2], %s191
          %s193 = smul.u32 2, %s20
          %s195 = ssub.s32 32, 32
          %196 = vsyncadd %s189, %s195
          %s197 = smul.addr %s193, 16
          %s198 = scalar_lea.hbm %s0, %s197
          %s200 = sshll.u32 %s192, 4
          %s201 = int_to_ptr.vmem [resolvable:$true] %s200
          %203 = dma.hbm_to_vmem [thread:$0]  %s198, 32, %s201, %s189
        $region28: #{tpu_custom_call.1} parent=23 // pred_fallthru
          _
        // Predicated region
        $region29: #{tpu_custom_call.1} parent=23 // pred_check
          %p204 = pneg %p66
        $region30: #{tpu_custom_call.1} parent=23 // pred_check_branch
          %206 = sbr.rel (%p204) target = $region32
        $region31: #{tpu_custom_call.1} parent=23 // pred_region
          %s207 = sand.u32 %s20, 1
          %s208 = scalar_lea.sflag [#allocation6], %s207
          %s209 = sand.u32 %s56, 1
          %s210 = smul.addr %s209, 2
          %s211 = scalar_lea.vmem [#allocation5], %s210
          %s212 = smul.u32 2, %s20
          %s214 = ssub.s32 32, 32
          %215 = vsyncadd %s208, %s214
          %s216 = smul.addr %s212, 16
          %s217 = scalar_lea.hbm %s1, %s216
          %s219 = sshll.u32 %s211, 4
          %s220 = int_to_ptr.vmem [resolvable:$true] %s219
          %222 = dma.hbm_to_vmem [thread:$0]  %s217, 32, %s220, %s208
        $region32: #{tpu_custom_call.1} parent=23 // pred_fallthru
          _
      $region24: #{tpu_custom_call.1} parent=5 // pred_fallthru
        _
      %p223 = scmp.le.s32.totalorder 1, %s20
      %p224 = scmp.lt.s32.totalorder %s20, 3
      %p225 = pnand %p223, %p224
      %p226 = pneg %p225
      // Predicated region
      $region33: #{tpu_custom_call.1} parent=5 // pred_check
        _
      $region34: #{tpu_custom_call.1} parent=5 // pred_check_branch
        %228 = sbr.rel (%p225) target = $region36
      $region35: #{tpu_custom_call.1} parent=5 // pred_region
        %s229 = ssub.s32 %s20, 1
        %s230 = sand.u32 %s33, 1
        %s231 = scalar_lea.sflag [#allocation3], %s230
        %s232 = sand.u32 %s33, 1
        %s233 = smul.addr %s232, 2
        %s234 = scalar_lea.vmem [#allocation2], %s233
        // Predicated region
        $region37: #{tpu_custom_call.1} parent=35 // pred_check
          %p235 = pneg %p46
        $region38: #{tpu_custom_call.1} parent=35 // pred_check_branch
          %237 = sbr.rel (%p235) target = $region40
        $region39: #{tpu_custom_call.1} parent=35 // pred_region
          %238 = dma.done %s231, 32
        $region40: #{tpu_custom_call.1} parent=35 // pred_fallthru
          _
        %s239 = sand.u32 %s25, 1
        %s240 = scalar_lea.sflag [#allocation6], %s239
        %s241 = sand.u32 %s59, 1
        %s242 = smul.addr %s241, 2
        %s243 = scalar_lea.vmem [#allocation5], %s242
        // Predicated region
        $region41: #{tpu_custom_call.1} parent=35 // pred_check
          %p244 = pneg %p72
        $region42: #{tpu_custom_call.1} parent=35 // pred_check_branch
          %246 = sbr.rel (%p244) target = $region44
        $region43: #{tpu_custom_call.1} parent=35 // pred_region
          %247 = dma.done %s240, 32
        $region44: #{tpu_custom_call.1} parent=35 // pred_fallthru
          _
        // Predicated region
        $region45: #{tpu_custom_call.1} parent=35 // pred_check
          %p248 = pneg %p93
        $region46: #{tpu_custom_call.1} parent=35 // pred_check_branch
          %250 = sbr.rel (%p248) target = $region48
        $region47: #{tpu_custom_call.1} parent=35 // pred_region
          %251 = dma.done [#allocation6], 640
        $region48: #{tpu_custom_call.1} parent=35 // pred_fallthru
          _
        // Predicated region
        $region49: #{tpu_custom_call.1} parent=35 // pred_check
          %p252 = pneg %p114
        $region50: #{tpu_custom_call.1} parent=35 // pred_check_branch
          %254 = sbr.rel (%p252) target = $region52
        $region51: #{tpu_custom_call.1} parent=35 // pred_region
          %255 = dma.done [#allocation9], 640
        $region52: #{tpu_custom_call.1} parent=35 // pred_fallthru
          _
        %s256 = sand.u32 %s33, 1
        %s257 = scalar_lea.sflag [#allocation3], %s256
        %s258 = sand.u32 %s33, 1
        %s259 = smul.addr %s258, 2
        %s260 = scalar_lea.vmem [#allocation2], %s259
        %p261 = pneg %p46
        %p262 = pneg %p43
        %s263 = sand.u32 %s25, 1
        %s264 = scalar_lea.sflag [#allocation6], %s263
        %s265 = sand.u32 %s59, 1
        %s266 = smul.addr %s265, 2
        %s267 = scalar_lea.vmem [#allocation5], %s266
        %p268 = pneg %p72
        %p269 = pneg %p69
        %p270 = pneg %p93
        %p271 = pneg %p90
        %p272 = pneg %p114
        %p273 = pneg %p111
        %p274 = pneg %p140
        %p275 = pneg %p137
        %s276 = sand.u32 %s127, 1
        %s277 = scalar_lea.sflag [#allocation4], %s276
        %s278 = sand.u32 %s127, 1
        %s279 = smul.addr %s278, 2
        %s280 = scalar_lea.vmem [#allocation10], %s279
        %s281 = smul.u32 2, %s25
        %s282 = smul.u32 2, %s25
        %s283 = smul.u32 2, %s25
        %v284 = vld [vmem:[%s234] sm:$0x3]
        %v285 = vld [vmem:[%s243] sm:$0x3]
        %v286 = vlaneseq
        %v287 = vshrl.u32 %v286, 7
        %v288 = vadd.s32 %v287, 8
        %v289 = vadd.s32 %v287, 16
        %v290 = vadd.s32 %v287, 24
        %v291 = vadd.s32 %v287, 32
        %v292 = vadd.s32 %v287, 40
        %v293 = vadd.s32 %v287, 48
        %v294 = vadd.s32 %v287, 56
        %v295 = vlaneseq
        %v296 = vshrl.u32 %v295, 7
        %v297 = vsub.s32 0, %v296
        %v298 = vrot.slane %v284, %v297
        %v299 = vlaneseq
        %v300 = vshrl.u32 %v299, 7
        %v301 = vsub.s32 1, %v300
        %v302 = vrot.slane %v284, %v301
        %vm303 = vcmp.eq.s32.totalorder %v287, %v298
        %vm304 = vcmp.eq.s32.totalorder %v287, %v302
        %vm305 = vcmp.eq.s32.totalorder %v288, %v298
        %vm306 = vcmp.eq.s32.totalorder %v288, %v302
        %vm307 = vcmp.eq.s32.totalorder %v289, %v298
        %vm308 = vcmp.eq.s32.totalorder %v289, %v302
        %vm309 = vcmp.eq.s32.totalorder %v290, %v298
        %vm310 = vcmp.eq.s32.totalorder %v290, %v302
        %vm311 = vcmp.eq.s32.totalorder %v291, %v298
        %vm312 = vcmp.eq.s32.totalorder %v291, %v302
        %vm313 = vcmp.eq.s32.totalorder %v292, %v298
        %vm314 = vcmp.eq.s32.totalorder %v292, %v302
        %vm315 = vcmp.eq.s32.totalorder %v293, %v298
        %vm316 = vcmp.eq.s32.totalorder %v293, %v302
        %vm317 = vcmp.eq.s32.totalorder %v294, %v298
        %vm318 = vcmp.eq.s32.totalorder %v294, %v302
        %v319 = vsel %vm303, 1, 0
        %v320 = vsel %vm304, 1, 0
        %v321 = vsel %vm305, 1, 0
        %v322 = vsel %vm306, 1, 0
        %v323 = vsel %vm307, 1, 0
        %v324 = vsel %vm308, 1, 0
        %v325 = vsel %vm309, 1, 0
        %v326 = vsel %vm310, 1, 0
        %v327 = vsel %vm311, 1, 0
        %v328 = vsel %vm312, 1, 0
        %v329 = vsel %vm313, 1, 0
        %v330 = vsel %vm314, 1, 0
        %v331 = vsel %vm315, 1, 0
        %v332 = vsel %vm316, 1, 0
        %v333 = vsel %vm317, 1, 0
        %v334 = vsel %vm318, 1, 0
        %v335 = vcvt.s32.f32 %v319
        %v336 = vcvt.s32.f32 %v320
        %v337 = vcvt.s32.f32 %v321
        %v338 = vcvt.s32.f32 %v322
        %v339 = vcvt.s32.f32 %v323
        %v340 = vcvt.s32.f32 %v324
        %v341 = vcvt.s32.f32 %v325
        %v342 = vcvt.s32.f32 %v326
        %v343 = vcvt.s32.f32 %v327
        %v344 = vcvt.s32.f32 %v328
        %v345 = vcvt.s32.f32 %v329
        %v346 = vcvt.s32.f32 %v330
        %v347 = vcvt.s32.f32 %v331
        %v348 = vcvt.s32.f32 %v332
        %v349 = vcvt.s32.f32 %v333
        %v350 = vcvt.s32.f32 %v334
        %v351 = vadd.s32 %v287, 64
        %v352 = vadd.s32 %v287, 72
        %v353 = vadd.s32 %v287, 80
        %v354 = vadd.s32 %v287, 88
        %v355 = vlaneseq
        %v356 = vshrl.u32 %v355, 7
        %v357 = vsub.s32 0, %v356
        %v358 = vrot.slane %v285, %v357
        %v359 = vlaneseq
        %v360 = vshrl.u32 %v359, 7
        %v361 = vsub.s32 1, %v360
        %v362 = vrot.slane %v285, %v361
        %vm363 = vcmp.eq.s32.totalorder %v287, %v358
        %vm364 = vcmp.eq.s32.totalorder %v287, %v362
        %vm365 = vcmp.eq.s32.totalorder %v288, %v358
        %vm366 = vcmp.eq.s32.totalorder %v288, %v362
        %vm367 = vcmp.eq.s32.totalorder %v289, %v358
        %vm368 = vcmp.eq.s32.totalorder %v289, %v362
        %vm369 = vcmp.eq.s32.totalorder %v290, %v358
        %vm370 = vcmp.eq.s32.totalorder %v290, %v362
        %vm371 = vcmp.eq.s32.totalorder %v291, %v358
        %vm372 = vcmp.eq.s32.totalorder %v291, %v362
        %vm373 = vcmp.eq.s32.totalorder %v292, %v358
        %vm374 = vcmp.eq.s32.totalorder %v292, %v362
        %vm375 = vcmp.eq.s32.totalorder %v293, %v358
        %vm376 = vcmp.eq.s32.totalorder %v293, %v362
        %vm377 = vcmp.eq.s32.totalorder %v294, %v358
        %vm378 = vcmp.eq.s32.totalorder %v294, %v362
        %vm379 = vcmp.eq.s32.totalorder %v351, %v358
        %vm380 = vcmp.eq.s32.totalorder %v351, %v362
        %vm381 = vcmp.eq.s32.totalorder %v352, %v358
        %vm382 = vcmp.eq.s32.totalorder %v352, %v362
        %vm383 = vcmp.eq.s32.totalorder %v353, %v358
        %vm384 = vcmp.eq.s32.totalorder %v353, %v362
        %vm385 = vcmp.eq.s32.totalorder %v354, %v358
        %vm386 = vcmp.eq.s32.totalorder %v354, %v362
        %v387 = vsel %vm363, 1, 0
        %v388 = vsel %vm364, 1, 0
        %v389 = vsel %vm365, 1, 0
        %v390 = vsel %vm366, 1, 0
        %v391 = vsel %vm367, 1, 0
        %v392 = vsel %vm368, 1, 0
        %v393 = vsel %vm369, 1, 0
        %v394 = vsel %vm370, 1, 0
        %v395 = vsel %vm371, 1, 0
        %v396 = vsel %vm372, 1, 0
        %v397 = vsel %vm373, 1, 0
        %v398 = vsel %vm374, 1, 0
        %v399 = vsel %vm375, 1, 0
        %v400 = vsel %vm376, 1, 0
        %v401 = vsel %vm377, 1, 0
        %v402 = vsel %vm378, 1, 0
        %v403 = vsel %vm379, 1, 0
        %v404 = vsel %vm380, 1, 0
        %v405 = vsel %vm381, 1, 0
        %v406 = vsel %vm382, 1, 0
        %v407 = vsel %vm383, 1, 0
        %v408 = vsel %vm384, 1, 0
        %v409 = vsel %vm385, 1, 0
        %v410 = vsel %vm386, 1, 0
        %v411 = vcvt.s32.f32 %v387
        %v412 = vcvt.s32.f32 %v388
        %v413 = vcvt.s32.f32 %v389
        %v414 = vcvt.s32.f32 %v390
        %v415 = vcvt.s32.f32 %v391
        %v416 = vcvt.s32.f32 %v392
        %v417 = vcvt.s32.f32 %v393
        %v418 = vcvt.s32.f32 %v394
        %v419 = vcvt.s32.f32 %v395
        %v420 = vcvt.s32.f32 %v396
        %v421 = vcvt.s32.f32 %v397
        %v422 = vcvt.s32.f32 %v398
        %v423 = vcvt.s32.f32 %v399
        %v424 = vcvt.s32.f32 %v400
        %v425 = vcvt.s32.f32 %v401
        %v426 = vcvt.s32.f32 %v402
        %v427 = vcvt.s32.f32 %v403
        %v428 = vcvt.s32.f32 %v404
        %v429 = vcvt.s32.f32 %v405
        %v430 = vcvt.s32.f32 %v406
        %v431 = vcvt.s32.f32 %v407
        %v432 = vcvt.s32.f32 %v408
        %v433 = vcvt.s32.f32 %v409
        %v434 = vcvt.s32.f32 %v410
        %v435 = vld [vmem:[#allocation7] sm:$0xff]
        %v436 = vld [vmem:[#allocation7 + $0x8] sm:$0xff]
        %v437 = vld [vmem:[#allocation7 + $0x10] sm:$0xff]
        %v438 = vld [vmem:[#allocation7 + $0x18] sm:$0xff]
        %v439 = vld [vmem:[#allocation7 + $0x20] sm:$0x3]
        %vm440 = vcmask 523264
        %v442 = vsel %vm440, %v435, 0
        %v445 = vsel %vm440, %v436, 0
        %v448 = vsel %vm440, %v437, 0
        %v451 = vsel %vm440, %v438, 0
        %v454 = vsel %vm440, %v439, 0
        %456 = vmatprep.subr.mxu0 %v336
        %457 = vmatpush1.msra.mxu0 %v335
        %458 = vmatprep.subr.mxu0 %v338
        %459 = vmatpush1.msra.mxu0 %v337
        %460 = vmatprep.subr.mxu0 %v340
        %461 = vmatpush1.msra.mxu0 %v339
        %462 = vmatprep.subr.mxu0 %v342
        %463 = vmatpush1.msra.mxu0 %v341
        %464 = vmatprep.subr.mxu0 %v344
        %465 = vmatpush1.msra.mxu0 %v343
        %466 = vmatprep.subr.mxu0 %v346
        %467 = vmatpush1.msra.mxu0 %v345
        %468 = vmatprep.subr.mxu0 %v348
        %469 = vmatpush1.msra.mxu0 %v347
        %470 = vmatprep.subr.mxu0 %v350
        %471 = vmatpush1.msra.mxu0 %v349
        %472 = vmatprep.subr.mxu0 0.0
        %473 = vmatpush1.msra.mxu0 0.0
        %474 = vmatprep.subr.mxu0 0.0
        %475 = vmatpush1.msra.mxu0 0.0
        %476 = vmatprep.subr.mxu0 0.0
        %477 = vmatpush1.msra.mxu0 0.0
        %478 = vmatprep.subr.mxu0 0.0
        %479 = vmatpush1.msra.mxu0 0.0
        %480 = vmatprep.subr.mxu0 0.0
        %481 = vmatpush1.msra.mxu0 0.0
        %482 = vmatprep.subr.mxu0 0.0
        %483 = vmatpush1.msra.mxu0 0.0
        %484 = vmatprep.subr.mxu0 0.0
        %485 = vmatpush1.msra.mxu0 0.0
        %486 = vmatprep.subr.mxu0 0.0
        %487 = vmatpush1.msra.mxu0 0.0
        %488 = vmatprep.subr.mxu0 0.0
        %489 = vmatpush1.msra.mxu0 0.0
        %490 = vmatprep.subr.mxu0 0.0
        %491 = vmatpush1.msra.mxu0 0.0
        %492 = vmatprep.subr.mxu0 0.0
        %493 = vmatpush1.msra.mxu0 0.0
        %494 = vmatprep.subr.mxu0 0.0
        %495 = vmatpush1.msra.mxu0 0.0
        %496 = vmatprep.subr.mxu0 0.0
        %497 = vmatpush1.msra.mxu0 0.0
        %498 = vmatprep.subr.mxu0 0.0
        %499 = vmatpush1.msra.mxu0 0.0
        %500 = vmatprep.subr.mxu0 0.0
        %501 = vmatpush1.msra.mxu0 0.0
        %502 = vmatprep.subr.mxu0 0.0
        %503 = vmatpush1.msra.mxu0 0.0
        %504 = vmatprep.subr.mxu0 0.0
        %505 = vmatpush1.msra.mxu0 0.0
        %506 = vmatprep.subr.mxu0 0.0
        %507 = vmatpush1.msra.mxu0 0.0
        %508 = vmatprep.subr.mxu0 0.0
        %509 = vmatpush1.msra.mxu0 0.0
        %510 = vmatprep.subr.mxu0 0.0
        %511 = vmatpush1.msra.mxu0 0.0
        %512 = vmatprep.subr.mxu0 0.0
        %513 = vmatpush1.msra.mxu0 0.0
        %514 = vmatprep.subr.mxu0 0.0
        %515 = vmatpush1.msra.mxu0 0.0
        %516 = vmatprep.subr.mxu0 0.0
        %517 = vmatpush1.msra.mxu0 0.0
        %518 = vmatprep.subr.mxu0 0.0
        %519 = vmatpush1.msra.mxu0 0.0
        %520 = vmatprep.mubr.f32.mxu0 0.0
        %521 = vmatmul.mubr.f32.gmra.mrb[0].mxu0 %v442
        %v522 = vpop.f32.mrb[0].mxu0
        %v523 = vadd.f32 0.0, %v522
        %v524 = vpop.f32.mrb[0].mxu0
        %v525 = vadd.f32 0.0, %v524
        %526 = vmatprep.mubr.f32.mxu0 0.0
        %527 = vmatmul.mubr.f32.gmra.mrb[0].mxu0 %v445
        %v528 = vpop.f32.mrb[0].mxu0
        %v529 = vadd.f32 0.0, %v528
        %v530 = vpop.f32.mrb[0].mxu0
        %v531 = vadd.f32 0.0, %v530
        %532 = vmatprep.mubr.f32.mxu0 0.0
        %533 = vmatmul.mubr.f32.gmra.mrb[0].mxu0 %v448
        %v534 = vpop.f32.mrb[0].mxu0
        %v535 = vadd.f32 0.0, %v534
        %v536 = vpop.f32.mrb[0].mxu0
        %v537 = vadd.f32 0.0, %v536
        %538 = vmatprep.mubr.f32.mxu0 0.0
        %539 = vmatmul.mubr.f32.gmra.mrb[0].mxu0 %v451
        %v540 = vpop.f32.mrb[0].mxu0
        %v541 = vadd.f32 0.0, %v540
        %v542 = vpop.f32.mrb[0].mxu0
        %v543 = vadd.f32 0.0, %v542
        %544 = vmatprep.mubr.f32.mxu0 0.0
        %545 = vmatmul.mubr.f32.gmra.mrb[0].mxu0 %v454
        %v546 = vpop.f32.mrb[0].mxu0
        %v547 = vadd.f32 0.0, %v546
        %v548 = vpop.f32.mrb[0].mxu0
        %v549 = vadd.f32 0.0, %v548
        %550 = vdwg.mxu0
        %v551 = vld [vmem:[#allocation8] sm:$0xff]
        %v552 = vld [vmem:[#allocation8 + $0x8] sm:$0xff]
        %v553 = vld [vmem:[#allocation8 + $0x10] sm:$0xff]
        %v554 = vld [vmem:[#allocation8 + $0x18] sm:$0xff]
        %v555 = vld [vmem:[#allocation8 + $0x20] sm:$0x3]
        %vm556 = vcmask 785408
        %v558 = vsel %vm556, %v551, 0
        %v561 = vsel %vm556, %v552, 0
        %v564 = vsel %vm556, %v553, 0
        %v567 = vsel %vm556, %v554, 0
        %v570 = vsel %vm556, %v555, 0
        %572 = vmatprep.subr.mxu0 %v412
        %573 = vmatpush1.msra.mxu0 %v411
        %574 = vmatprep.subr.mxu0 %v414
        %575 = vmatpush1.msra.mxu0 %v413
        %576 = vmatprep.subr.mxu0 %v416
        %577 = vmatpush1.msra.mxu0 %v415
        %578 = vmatprep.subr.mxu0 %v418
        %579 = vmatpush1.msra.mxu0 %v417
        %580 = vmatprep.subr.mxu0 %v420
        %581 = vmatpush1.msra.mxu0 %v419
        %582 = vmatprep.subr.mxu0 %v422
        %583 = vmatpush1.msra.mxu0 %v421
        %584 = vmatprep.subr.mxu0 %v424
        %585 = vmatpush1.msra.mxu0 %v423
        %586 = vmatprep.subr.mxu0 %v426
        %587 = vmatpush1.msra.mxu0 %v425
        %588 = vmatprep.subr.mxu0 %v428
        %589 = vmatpush1.msra.mxu0 %v427
        %590 = vmatprep.subr.mxu0 %v430
        %591 = vmatpush1.msra.mxu0 %v429
        %592 = vmatprep.subr.mxu0 %v432
        %593 = vmatpush1.msra.mxu0 %v431
        %594 = vmatprep.subr.mxu0 %v434
        %595 = vmatpush1.msra.mxu0 %v433
        %596 = vmatprep.subr.mxu0 0.0
        %597 = vmatpush1.msra.mxu0 0.0
        %598 = vmatprep.subr.mxu0 0.0
        %599 = vmatpush1.msra.mxu0 0.0
        %600 = vmatprep.subr.mxu0 0.0
        %601 = vmatpush1.msra.mxu0 0.0
        %602 = vmatprep.subr.mxu0 0.0
        %603 = vmatpush1.msra.mxu0 0.0
        %604 = vmatprep.subr.mxu0 0.0
        %605 = vmatpush1.msra.mxu0 0.0
        %606 = vmatprep.subr.mxu0 0.0
        %607 = vmatpush1.msra.mxu0 0.0
        %608 = vmatprep.subr.mxu0 0.0
        %609 = vmatpush1.msra.mxu0 0.0
        %610 = vmatprep.subr.mxu0 0.0
        %611 = vmatpush1.msra.mxu0 0.0
        %612 = vmatprep.subr.mxu0 0.0
        %613 = vmatpush1.msra.mxu0 0.0
        %614 = vmatprep.subr.mxu0 0.0
        %615 = vmatpush1.msra.mxu0 0.0
        %616 = vmatprep.subr.mxu0 0.0
        %617 = vmatpush1.msra.mxu0 0.0
        %618 = vmatprep.subr.mxu0 0.0
        %619 = vmatpush1.msra.mxu0 0.0
        %620 = vmatprep.subr.mxu0 0.0
        %621 = vmatpush1.msra.mxu0 0.0
        %622 = vmatprep.subr.mxu0 0.0
        %623 = vmatpush1.msra.mxu0 0.0
        %624 = vmatprep.subr.mxu0 0.0
        %625 = vmatpush1.msra.mxu0 0.0
        %626 = vmatprep.subr.mxu0 0.0
        %627 = vmatpush1.msra.mxu0 0.0
        %628 = vmatprep.subr.mxu0 0.0
        %629 = vmatpush1.msra.mxu0 0.0
        %630 = vmatprep.subr.mxu0 0.0
        %631 = vmatpush1.msra.mxu0 0.0
        %632 = vmatprep.subr.mxu0 0.0
        %633 = vmatpush1.msra.mxu0 0.0
        %634 = vmatprep.subr.mxu0 0.0
        %635 = vmatpush1.msra.mxu0 0.0
        %636 = vmatprep.mubr.f32.mxu0 0.0
        %637 = vmatmul.mubr.f32.gmra.mrb[0].mxu0 %v558
        %v638 = vpop.f32.mrb[0].mxu0
        %v639 = vadd.f32 0.0, %v638
        %v640 = vpop.f32.mrb[0].mxu0
        %v641 = vadd.f32 0.0, %v640
        %642 = vmatprep.mubr.f32.mxu0 0.0
        %643 = vmatmul.mubr.f32.gmra.mrb[0].mxu0 %v561
        %v644 = vpop.f32.mrb[0].mxu0
        %v645 = vadd.f32 0.0, %v644
        %v646 = vpop.f32.mrb[0].mxu0
        %v647 = vadd.f32 0.0, %v646
        %648 = vmatprep.mubr.f32.mxu0 0.0
        %649 = vmatmul.mubr.f32.gmra.mrb[0].mxu0 %v564
        %v650 = vpop.f32.mrb[0].mxu0
        %v651 = vadd.f32 0.0, %v650
        %v652 = vpop.f32.mrb[0].mxu0
        %v653 = vadd.f32 0.0, %v652
        %654 = vmatprep.mubr.f32.mxu0 0.0
        %655 = vmatmul.mubr.f32.gmra.mrb[0].mxu0 %v567
        %v656 = vpop.f32.mrb[0].mxu0
        %v657 = vadd.f32 0.0, %v656
        %v658 = vpop.f32.mrb[0].mxu0
        %v659 = vadd.f32 0.0, %v658
        %660 = vmatprep.mubr.f32.mxu0 0.0
        %661 = vmatmul.mubr.f32.gmra.mrb[0].mxu0 %v570
        %v662 = vpop.f32.mrb[0].mxu0
        %v663 = vadd.f32 0.0, %v662
        %v664 = vpop.f32.mrb[0].mxu0
        %v665 = vadd.f32 0.0, %v664
        %666 = vdwg.mxu0
        %v667 = vmul.f32 %v523, %v639
        %v668 = vmul.f32 %v525, %v641
        %v669 = vmul.f32 %v529, %v645
        %v670 = vmul.f32 %v531, %v647
        %v671 = vmul.f32 %v535, %v651
        %v672 = vmul.f32 %v537, %v653
        %v673 = vmul.f32 %v541, %v657
        %v674 = vmul.f32 %v543, %v659
        %v675 = vmul.f32 %v547, %v663
        %v676 = vmul.f32 %v549, %v665
        %v677 = vadd.f32 %v667, %v669
        %v678 = vadd.f32 %v677, %v671
        %v679 = vadd.f32 %v678, %v673
        %vm680 = vcmask 1041408
        %v681 = vsel %vm680, %v675, 0.0
        %v682 = vadd.f32 %v679, %v681
        %v683 = vrot.slane %v682, 4
        %v684 = vadd.f32 %v682, %v683
        %v685 = vrot.slane %v684, 2
        %v686 = vadd.f32 %v684, %v685
        %v687 = vrot.slane %v686, 1
        %v688 = vadd.f32 %v686, %v687
        %v689 = vadd.f32 %v668, %v670
        %v690 = vadd.f32 %v689, %v672
        %v691 = vadd.f32 %v690, %v674
        %v692 = vsel %vm680, %v676, 0.0
        %v693 = vadd.f32 %v691, %v692
        %v694 = vrot.slane %v693, 4
        %v695 = vadd.f32 %v693, %v694
        %v696 = vrot.slane %v695, 2
        %v697 = vadd.f32 %v695, %v696
        %v698 = vrot.slane %v697, 1
        %v699 = vadd.f32 %v697, %v698
        %v702 = vcombine.low %v688, %v699
        %v704 = vunpack.c.l.s4 1966171168
        %v705 = vunpack.c.0.s8 %v704
        %v706 = vlaneseq
        %v707 = vshrl.u32 %v706, 7
        %v708 = vsub.s32 %v705, %v707
        %v709 = vrot.slane %v702, %v708
        %v711 = vunpack.c.l.s4 1966171168
        %v712 = vunpack.c.0.s8 %v711
        %v713 = vlaneseq
        %v714 = vshrl.u32 %v713, 7
        %v715 = vsub.s32 %v712, %v714
        %v716 = vrot.slane %v709, %v715
        %v718 = vlaneseq
        %vm719 = vcmp.ge.s32.totalorder %v718, 0
        %vm720 = vcmp.lt.s32.totalorder %v718, 256
        %vm721 = vmand %vm719, %vm720
        %722 = vst.msk [vmem:[%s280] sm:$0x3] %vm721, %v716
        %s723 = sand.u32 %s127, 1
        %s724 = scalar_lea.sflag [#allocation4], %s723
        %s725 = sand.u32 %s127, 1
        %s726 = smul.addr %s725, 2
        %s727 = scalar_lea.vmem [#allocation10], %s726
        // Predicated region
        $region53: #{tpu_custom_call.1} parent=35 // pred_check
          %p728 = pneg %p137
        $region54: #{tpu_custom_call.1} parent=35 // pred_check_branch
          %730 = sbr.rel (%p728) target = $region56
        $region55: #{tpu_custom_call.1} parent=35 // pred_region
          %s731 = smul.u32 2, %s25
          %s733 = ssub.s32 32, 32
          %734 = vsyncadd %s724, %s733
          %s735 = smul.addr %s731, 16
          %s736 = scalar_lea.hbm %s4, %s735
          %s738 = sshll.u32 %s727, 4
          %s739 = int_to_ptr.vmem [resolvable:$true] %s738
          %741 = dma.vmem_to_hbm [thread:$0]  %s739, 32, %s736, %s724
        $region56: #{tpu_custom_call.1} parent=35 // pred_fallthru
          _
      $region36: #{tpu_custom_call.1} parent=5 // pred_fallthru
        _
      %p742 = scmp.le.s32.totalorder 2, %s20
      // Predicated region
      $region57: #{tpu_custom_call.1} parent=5 // pred_check
        %p743 = pneg %p742
      $region58: #{tpu_custom_call.1} parent=5 // pred_check_branch
        %745 = sbr.rel (%p743) target = $region60
      $region59: #{tpu_custom_call.1} parent=5 // pred_region
        %s746 = ssub.s32 %s20, 2
        // Predicated region
        $region61: #{tpu_custom_call.1} parent=59 // pred_check
          %p747 = pneg %p143
        $region62: #{tpu_custom_call.1} parent=59 // pred_check_branch
          %749 = sbr.rel (%p747) target = $region64
        $region63: #{tpu_custom_call.1} parent=59 // pred_region
          %s750 = sand.u32 %s128, 1
          %s751 = scalar_lea.sflag [#allocation4], %s750
          %s752 = sand.u32 %s128, 1
          %s753 = smul.addr %s752, 2
          %s754 = scalar_lea.vmem [#allocation10], %s753
          %755 = dma.done %s751, 32
        $region64: #{tpu_custom_call.1} parent=59 // pred_fallthru
          _
      $region60: #{tpu_custom_call.1} parent=5 // pred_fallthru
        _
    $region6: #{tpu_custom_call.1} parent=1 // loop_footer
      %s24 = sadd.s32 1, %s20
    $region7: #{tpu_custom_call.1} parent=1 // loop_footer_branch
      %19 = sbr.rel target = $region3
    $region8: #{tpu_custom_call.1} parent=1 // loop_exit
      _
    %756 = vsyncpa [#allocation3], 1
    %s757 = scalar_lea.sflag [#allocation3], 1
    %758 = vsyncpa %s757, 1
    %759 = vsyncpa [#allocation6], 1
    %s760 = scalar_lea.sflag [#allocation6], 1
    %761 = vsyncpa %s760, 1
    %762 = vsyncpa [#allocation9], 1
    %763 = vsyncpa [#allocation4], 1
    %s764 = scalar_lea.sflag [#allocation4], 1
    %765 = vsyncpa %s764, 1

</llo_original>
